<compile_context>
chip_gen: v7x
topology: tpu7x:2x2x1
jax: 0.10.0
libtpu: 0.0.40
codegen_flags: <defaults>
</compile_context>

<pallas_src>
import functools

import jax
import jax.numpy as jnp
from jax.experimental import pallas as pl
from jax.experimental.pallas import tpu as pltpu

POINT_DIM = 2
TIME_EMBED_DIM = 64
TE_PAD = 128          # layer-1 K, lane-aligned (cols/rows >= 64 are zero)
COND_EMBED_DIM = 16
HIDDEN_DIM = 256
OUT_PAD = 128         # lane-dense padded output width (cols >= 2 are zero)
NUM_CLASSES = 2       # the c * (E1[1]-E1[0]) fusion assumes exactly 2 classes

# ---- bf16 matmul-weight blob layout (all rows HIDDEN_DIM = 256 wide) -------
ROW_W1T = 0                       # (Wt2 @ W1t), rows 64..127 zero
ROW_W2 = TE_PAD                   # 128
ROW_W3 = ROW_W2 + HIDDEN_DIM      # 384
W_ROWS = ROW_W3 + HIDDEN_DIM      # 640

# ---- f32 vector blob layout (16 rows x 256) --------------------------------
ROW_WT1 = 0      # Linear(1,64) weight, cols >= 64 zero
ROW_BT1 = 1      # Linear(1,64) bias,   cols >= 64 zero
ROW_W1X0 = 2     # W1 row for x[:, 0]
ROW_W1X1 = 3     # W1 row for x[:, 1]
ROW_E1D = 4      # (emb[1] - emb[0]) @ W1c
ROW_B1 = 5       # b1 + bt2 @ W1t + emb[0] @ W1c
ROW_B2 = 6
ROW_B3 = 7
ROW_B4 = 8       # cols >= 2 zero
V_ROWS = 16


def _silu(v):
    # sigmoid(x) = 0.5 * (1 + tanh(0.5*x)): one EUP push instead of exp+recip.
    return v * (0.5 * (1.0 + jnp.tanh(0.5 * v)))


def mlp_cond_kernel(inp_ref, wblob_ref, w4_ref, vblob_ref, out_ref):
    f32 = jnp.float32
    bf16 = jnp.bfloat16

    # packed input columns: [x0, x1, t, c_float]
    x0 = inp_ref[:, 0:1]
    x1 = inp_ref[:, 1:2]
    t = inp_ref[:, 2:3]
    cf = inp_ref[:, 3:4]

    # time-embed first layer: Linear(1,64) + SiLU, computed 128 lanes wide
    # (lanes >= 64 are silu(0) = 0 and hit zero rows of the fused weight).
    wt1 = vblob_ref[ROW_WT1:ROW_WT1 + 1, 0:TE_PAD]
    bt1 = vblob_ref[ROW_BT1:ROW_BT1 + 1, 0:TE_PAD]
    t_h = _silu(t * wt1 + bt1)                                      # (TM, 128)

    # fused layer 1: one K=128 MXU matmul + three VPU broadcast terms + bias.
    w1t = wblob_ref[ROW_W1T:ROW_W1T + TE_PAD, :]                    # (128, 256)
    h = jnp.dot(t_h.astype(bf16), w1t, preferred_element_type=f32)
    h = (h
         + x0 * vblob_ref[ROW_W1X0:ROW_W1X0 + 1, :]
         + x1 * vblob_ref[ROW_W1X1:ROW_W1X1 + 1, :]
         + cf * vblob_ref[ROW_E1D:ROW_E1D + 1, :]
         + vblob_ref[ROW_B1:ROW_B1 + 1, :])
    h = _silu(h)

    h = _silu(jnp.dot(h.astype(bf16), wblob_ref[ROW_W2:ROW_W2 + HIDDEN_DIM, :],
                      preferred_element_type=f32)
              + vblob_ref[ROW_B2:ROW_B2 + 1, :])
    h = _silu(jnp.dot(h.astype(bf16), wblob_ref[ROW_W3:ROW_W3 + HIDDEN_DIM, :],
                      preferred_element_type=f32)
              + vblob_ref[ROW_B3:ROW_B3 + 1, :])

    # lane-dense (TM, 128) store; only cols [0:2] are meaningful.
    out_ref[...] = (jnp.dot(h.astype(bf16), w4_ref[...],
                            preferred_element_type=f32)
                    + vblob_ref[ROW_B4:ROW_B4 + 1, 0:OUT_PAD])


def make_params(key):
    """Raw parameters with the PyTorch module's shapes (weights transposed)."""
    def linear(key, fan_in, fan_out):
        kw, kb = jax.random.split(key)
        bound = 1.0 / jnp.sqrt(jnp.float32(fan_in))
        w = jax.random.uniform(kw, (fan_in, fan_out), jnp.float32, -bound, bound)
        b = jax.random.uniform(kb, (1, fan_out), jnp.float32, -bound, bound)
        return w, b

    keys = jax.random.split(key, 8)
    wt1, bt1 = linear(keys[0], 1, TIME_EMBED_DIM)
    wt2, bt2 = linear(keys[1], TIME_EMBED_DIM, TIME_EMBED_DIM)
    emb = jax.random.normal(keys[2], (NUM_CLASSES, COND_EMBED_DIM), jnp.float32)
    in_dim = POINT_DIM + TIME_EMBED_DIM + COND_EMBED_DIM
    w1, b1 = linear(keys[3], in_dim, HIDDEN_DIM)
    w2, b2 = linear(keys[4], HIDDEN_DIM, HIDDEN_DIM)
    w3, b3 = linear(keys[5], HIDDEN_DIM, HIDDEN_DIM)
    w4, b4 = linear(keys[6], HIDDEN_DIM, POINT_DIM)
    return dict(wt1=wt1, bt1=bt1, wt2=wt2, bt2=bt2, emb=emb,
                w1=w1, b1=b1, w2=w2, b2=b2, w3=w3, b3=b3, w4=w4, b4=b4)


def pack_params(p):
    """Fold the linear embedding paths and pack into the three kernel blobs."""
    # The class-embedding fusion below is exact only for 2 classes, c in {0,1}.
    assert NUM_CLASSES == 2 and p["emb"].shape[0] == 2

    w1 = p["w1"]
    w1x = w1[:POINT_DIM]                                         # (2, 256)
    w1t = w1[POINT_DIM:POINT_DIM + TIME_EMBED_DIM]               # (64, 256)
    w1c = w1[POINT_DIM + TIME_EMBED_DIM:]                        # (16, 256)

    w1t_fused = p["wt2"] @ w1t                                   # (64, 256)
    e1 = p["emb"] @ w1c                                          # (2, 256)
    b1_fused = p["b1"] + p["bt2"] @ w1t + e1[0:1]                # (1, 256)
    e1_diff = e1[1:2] - e1[0:1]                                  # (1, 256)

    wblob = jnp.zeros((W_ROWS, HIDDEN_DIM), jnp.float32)
    wblob = wblob.at[ROW_W1T:ROW_W1T + TIME_EMBED_DIM].set(w1t_fused)
    wblob = wblob.at[ROW_W2:ROW_W2 + HIDDEN_DIM].set(p["w2"])
    wblob = wblob.at[ROW_W3:ROW_W3 + HIDDEN_DIM].set(p["w3"])
    wblob = wblob.astype(jnp.bfloat16)                           # 320 KB

    w4 = jnp.zeros((HIDDEN_DIM, OUT_PAD), jnp.float32)
    w4 = w4.at[:, :POINT_DIM].set(p["w4"]).astype(jnp.bfloat16)  # 64 KB

    vblob = jnp.zeros((V_ROWS, HIDDEN_DIM), jnp.float32)         # 16 KB
    vblob = vblob.at[ROW_WT1, :TIME_EMBED_DIM].set(p["wt1"][0])
    vblob = vblob.at[ROW_BT1, :TIME_EMBED_DIM].set(p["bt1"][0])
    vblob = vblob.at[ROW_W1X0].set(w1x[0])
    vblob = vblob.at[ROW_W1X1].set(w1x[1])
    vblob = vblob.at[ROW_E1D].set(e1_diff[0])
    vblob = vblob.at[ROW_B1].set(b1_fused[0])
    vblob = vblob.at[ROW_B2].set(p["b2"][0])
    vblob = vblob.at[ROW_B3].set(p["b3"][0])
    vblob = vblob.at[ROW_B4, :POINT_DIM].set(p["b4"][0])
    return wblob, w4, vblob


def _round_up(n, m):
    return (n + m - 1) // m * m


@functools.partial(jax.jit, static_argnames=("tm",))
def simple_point_mlp_cond(wblob, w4, vblob, x, t, c, *, tm=None):
    """x: (B, 2) f32, t: (B,) f32, c: (B,) int32 in {0,1} -> (B, 2) f32."""
    b = x.shape[0]
    inp = jnp.concatenate(
        [x.astype(jnp.float32),
         t.astype(jnp.float32).reshape(b, 1),
         c.astype(jnp.float32).reshape(b, 1)], axis=-1)            # (B, 4)

    # Batch tile: multiple of 8 sublanes; 256 fills the MXU M on v6e/v7x and
    # keeps all double-buffered tiles far under the v7x 32 MiB scoped VMEM.
    if tm is None:
        tm = 256 if b >= 256 else _round_up(b, 8)
    tm = _round_up(tm, 8)
    b_pad = _round_up(b, tm)
    if b_pad != b:
        inp = jnp.pad(inp, ((0, b_pad - b), (0, 0)))
    grid = (b_pad // tm,)

    flops = 2 * b_pad * HIDDEN_DIM * (TE_PAD + HIDDEN_DIM + HIDDEN_DIM + OUT_PAD)
    transcendentals = b_pad * (TE_PAD + 3 * HIDDEN_DIM)            # one tanh/elem
    bytes_accessed = (wblob.size * 2 + w4.size * 2 + vblob.size * 4
                      + b_pad * 4 * 4 + b_pad * OUT_PAD * 4)

    # Weight blobs use a constant index_map: DMA'd into VMEM once, resident
    # across every batch tile of the grid.
    out = pl.pallas_call(
        mlp_cond_kernel,
        out_shape=jax.ShapeDtypeStruct((b_pad, OUT_PAD), jnp.float32),
        grid=grid,
        in_specs=[
            pl.BlockSpec((tm, 4), lambda i: (i, 0)),
            pl.BlockSpec((W_ROWS, HIDDEN_DIM), lambda i: (0, 0)),
            pl.BlockSpec((HIDDEN_DIM, OUT_PAD), lambda i: (0, 0)),
            pl.BlockSpec((V_ROWS, HIDDEN_DIM), lambda i: (0, 0)),
        ],
        out_specs=pl.BlockSpec((tm, OUT_PAD), lambda i: (i, 0)),
        compiler_params=pltpu.CompilerParams(
            dimension_semantics=("parallel",)),
        cost_estimate=pl.CostEstimate(flops=flops,
                                      transcendentals=transcendentals,
                                      bytes_accessed=bytes_accessed),
    )(inp, wblob, w4, vblob)
    return out[:b, :POINT_DIM]


def reference(params, x, t, c):
    """Pure-JAX f32 reference with the original (unfused) structure."""
    t2d = t.astype(jnp.float32).reshape(-1, 1)
    t_h = jax.nn.silu(t2d @ params["wt1"] + params["bt1"])
    t_emb = t_h @ params["wt2"] + params["bt2"]
    c_emb = params["emb"][c]
    xt = jnp.concatenate([x, t_emb, c_emb], axis=-1)
    h = jax.nn.silu(xt @ params["w1"] + params["b1"])
    h = jax.nn.silu(h @ params["w2"] + params["b2"])
    h = jax.nn.silu(h @ params["w3"] + params["b3"])
    return h @ params["w4"] + params["b4"]


if __name__ == "__main__":
    key = jax.random.PRNGKey(0)
    kp, kx, kt, kc = jax.random.split(key, 4)

    B = 40
    params = make_params(kp)
    wblob, w4, vblob = pack_params(params)
    x = jax.random.normal(kx, (B, POINT_DIM), jnp.float32)
    t = jax.random.uniform(kt, (B,), jnp.float32)
    c = jax.random.randint(kc, (B,), 0, NUM_CLASSES, jnp.int32)

    # tm=16 forces a 3-step batch grid at this small B so the pipelined /
    # weight-resident path is exercised; default tm picks 256 for big batches.
    out = simple_point_mlp_cond(wblob, w4, vblob, x, t, c, tm=16)
    out = jax.block_until_ready(out)

    ref = reference(params, x, t, c)
    assert out.shape == (B, POINT_DIM)
    max_err = float(jnp.max(jnp.abs(out - ref)))
    # bf16 matmul weights (f32 accumulate) -> tolerance loosened vs f32 rev.
    assert jnp.allclose(out, ref, atol=2e-2, rtol=2e-2), (max_err, out, ref)
    print("KERNEL_OK")
</pallas_src>

<mosaic_0001>
module attributes {stable_mosaic.version = 11 : i64} {
  func.func @mlp_cond_kernel(%arg0: i32, %arg1: memref<16x4xf32, #tpu.memory_space<vmem>>, %arg2: memref<640x256xbf16, #tpu.memory_space<vmem>>, %arg3: memref<256x128xbf16, #tpu.memory_space<vmem>>, %arg4: memref<16x256xf32, #tpu.memory_space<vmem>>, %arg5: memref<16x128xf32, #tpu.memory_space<vmem>>) attributes {dimension_semantics = [#tpu.dimension_semantics<parallel>], iteration_bounds = array<i64: 3>, scalar_prefetch = 0 : i64, scratch_operands = 0 : i64, tpu.core_type = #tpu.core_type<tc>, window_params = [{transform_indices = @transform_0, window_bounds = array<i64: 16, 4>}, {pipeline_mode = #tpu.pipeline_mode<synchronous>, transform_indices = @transform_1, window_bounds = array<i64: 640, 256>}, {pipeline_mode = #tpu.pipeline_mode<synchronous>, transform_indices = @transform_2, window_bounds = array<i64: 256, 128>}, {pipeline_mode = #tpu.pipeline_mode<synchronous>, transform_indices = @transform_3, window_bounds = array<i64: 16, 256>}, {transform_indices = @transform_4, window_bounds = array<i64: 16, 128>}]} {
    %c0 = arith.constant 0 : index
    %c0_0 = arith.constant 0 : index
    %0 = vector.load %arg1[%c0, %c0_0] : memref<16x4xf32, #tpu.memory_space<vmem>>, vector<16x1xf32>
    %c0_1 = arith.constant 0 : index
    %c1 = arith.constant 1 : index
    %1 = vector.load %arg1[%c0_1, %c1] : memref<16x4xf32, #tpu.memory_space<vmem>>, vector<16x1xf32>
    %c0_2 = arith.constant 0 : index
    %c2 = arith.constant 2 : index
    %2 = vector.load %arg1[%c0_2, %c2] : memref<16x4xf32, #tpu.memory_space<vmem>>, vector<16x1xf32>
    %c0_3 = arith.constant 0 : index
    %c3 = arith.constant 3 : index
    %3 = vector.load %arg1[%c0_3, %c3] : memref<16x4xf32, #tpu.memory_space<vmem>>, vector<16x1xf32>
    %c0_4 = arith.constant 0 : index
    %c0_5 = arith.constant 0 : index
    %4 = vector.load %arg4[%c0_4, %c0_5] : memref<16x256xf32, #tpu.memory_space<vmem>>, vector<1x128xf32>
    %c1_6 = arith.constant 1 : index
    %c0_7 = arith.constant 0 : index
    %5 = vector.load %arg4[%c1_6, %c0_7] : memref<16x256xf32, #tpu.memory_space<vmem>>, vector<1x128xf32>
    %6 = vector.broadcast %2 : vector<16x1xf32> to vector<16x128xf32>
    %7 = vector.broadcast %4 : vector<1x128xf32> to vector<16x128xf32>
    %8 = arith.mulf %6, %7 : vector<16x128xf32>
    %9 = vector.broadcast %5 : vector<1x128xf32> to vector<16x128xf32>
    %10 = arith.addf %8, %9 : vector<16x128xf32>
    %cst = arith.constant 5.000000e-01 : f32
    %11 = vector.broadcast %cst : f32 to vector<16x128xf32>
    %12 = arith.mulf %11, %10 : vector<16x128xf32>
    %13 = math.tanh %12 : vector<16x128xf32>
    %cst_8 = arith.constant 1.000000e+00 : f32
    %14 = vector.broadcast %cst_8 : f32 to vector<16x128xf32>
    %15 = arith.addf %14, %13 : vector<16x128xf32>
    %cst_9 = arith.constant 5.000000e-01 : f32
    %16 = vector.broadcast %cst_9 : f32 to vector<16x128xf32>
    %17 = arith.mulf %16, %15 : vector<16x128xf32>
    %18 = arith.mulf %10, %17 : vector<16x128xf32>
    %c0_10 = arith.constant 0 : index
    %c0_11 = arith.constant 0 : index
    %19 = vector.load %arg2[%c0_10, %c0_11] : memref<640x256xbf16, #tpu.memory_space<vmem>>, vector<128x256xbf16>
    %20 = arith.truncf %18 : vector<16x128xf32> to vector<16x128xbf16>
    %cst_12 = arith.constant dense<0.000000e+00> : vector<16x256xf32>
    %21 = tpu.matmul %20, %19, %cst_12 {dimension_numbers = #tpu.dot_dimension_numbers<[1], [0], [0], [1], [0, 0, 1, 1], [], []>} : vector<16x128xbf16>, vector<128x256xbf16>, vector<16x256xf32> -> vector<16x256xf32>
    %c2_13 = arith.constant 2 : index
    %c0_14 = arith.constant 0 : index
    %22 = vector.load %arg4[%c2_13, %c0_14] : memref<16x256xf32, #tpu.memory_space<vmem>>, vector<1x256xf32>
    %23 = vector.broadcast %0 : vector<16x1xf32> to vector<16x256xf32>
    %24 = vector.broadcast %22 : vector<1x256xf32> to vector<16x256xf32>
    %25 = arith.mulf %23, %24 : vector<16x256xf32>
    %26 = arith.addf %21, %25 : vector<16x256xf32>
    %c3_15 = arith.constant 3 : index
    %c0_16 = arith.constant 0 : index
    %27 = vector.load %arg4[%c3_15, %c0_16] : memref<16x256xf32, #tpu.memory_space<vmem>>, vector<1x256xf32>
    %28 = vector.broadcast %1 : vector<16x1xf32> to vector<16x256xf32>
    %29 = vector.broadcast %27 : vector<1x256xf32> to vector<16x256xf32>
    %30 = arith.mulf %28, %29 : vector<16x256xf32>
    %31 = arith.addf %26, %30 : vector<16x256xf32>
    %c4 = arith.constant 4 : index
    %c0_17 = arith.constant 0 : index
    %32 = vector.load %arg4[%c4, %c0_17] : memref<16x256xf32, #tpu.memory_space<vmem>>, vector<1x256xf32>
    %33 = vector.broadcast %3 : vector<16x1xf32> to vector<16x256xf32>
    %34 = vector.broadcast %32 : vector<1x256xf32> to vector<16x256xf32>
    %35 = arith.mulf %33, %34 : vector<16x256xf32>
    %36 = arith.addf %31, %35 : vector<16x256xf32>
    %c5 = arith.constant 5 : index
    %c0_18 = arith.constant 0 : index
    %37 = vector.load %arg4[%c5, %c0_18] : memref<16x256xf32, #tpu.memory_space<vmem>>, vector<1x256xf32>
    %38 = vector.broadcast %37 : vector<1x256xf32> to vector<16x256xf32>
    %39 = arith.addf %36, %38 : vector<16x256xf32>
    %cst_19 = arith.constant 5.000000e-01 : f32
    %40 = vector.broadcast %cst_19 : f32 to vector<16x256xf32>
    %41 = arith.mulf %40, %39 : vector<16x256xf32>
    %42 = math.tanh %41 : vector<16x256xf32>
    %cst_20 = arith.constant 1.000000e+00 : f32
    %43 = vector.broadcast %cst_20 : f32 to vector<16x256xf32>
    %44 = arith.addf %43, %42 : vector<16x256xf32>
    %cst_21 = arith.constant 5.000000e-01 : f32
    %45 = vector.broadcast %cst_21 : f32 to vector<16x256xf32>
    %46 = arith.mulf %45, %44 : vector<16x256xf32>
    %47 = arith.mulf %39, %46 : vector<16x256xf32>
    %48 = arith.truncf %47 : vector<16x256xf32> to vector<16x256xbf16>
    %c128 = arith.constant 128 : index
    %c0_22 = arith.constant 0 : index
    %49 = vector.load %arg2[%c128, %c0_22] : memref<640x256xbf16, #tpu.memory_space<vmem>>, vector<256x256xbf16>
    %cst_23 = arith.constant dense<0.000000e+00> : vector<16x256xf32>
    %50 = tpu.matmul %48, %49, %cst_23 {dimension_numbers = #tpu.dot_dimension_numbers<[1], [0], [0], [1], [0, 0, 1, 1], [], []>} : vector<16x256xbf16>, vector<256x256xbf16>, vector<16x256xf32> -> vector<16x256xf32>
    %c6 = arith.constant 6 : index
    %c0_24 = arith.constant 0 : index
    %51 = vector.load %arg4[%c6, %c0_24] : memref<16x256xf32, #tpu.memory_space<vmem>>, vector<1x256xf32>
    %52 = vector.broadcast %51 : vector<1x256xf32> to vector<16x256xf32>
    %53 = arith.addf %50, %52 : vector<16x256xf32>
    %cst_25 = arith.constant 5.000000e-01 : f32
    %54 = vector.broadcast %cst_25 : f32 to vector<16x256xf32>
    %55 = arith.mulf %54, %53 : vector<16x256xf32>
    %56 = math.tanh %55 : vector<16x256xf32>
    %cst_26 = arith.constant 1.000000e+00 : f32
    %57 = vector.broadcast %cst_26 : f32 to vector<16x256xf32>
    %58 = arith.addf %57, %56 : vector<16x256xf32>
    %cst_27 = arith.constant 5.000000e-01 : f32
    %59 = vector.broadcast %cst_27 : f32 to vector<16x256xf32>
    %60 = arith.mulf %59, %58 : vector<16x256xf32>
    %61 = arith.mulf %53, %60 : vector<16x256xf32>
    %62 = arith.truncf %61 : vector<16x256xf32> to vector<16x256xbf16>
    %c384 = arith.constant 384 : index
    %c0_28 = arith.constant 0 : index
    %63 = vector.load %arg2[%c384, %c0_28] : memref<640x256xbf16, #tpu.memory_space<vmem>>, vector<256x256xbf16>
    %cst_29 = arith.constant dense<0.000000e+00> : vector<16x256xf32>
    %64 = tpu.matmul %62, %63, %cst_29 {dimension_numbers = #tpu.dot_dimension_numbers<[1], [0], [0], [1], [0, 0, 1, 1], [], []>} : vector<16x256xbf16>, vector<256x256xbf16>, vector<16x256xf32> -> vector<16x256xf32>
    %c7 = arith.constant 7 : index
    %c0_30 = arith.constant 0 : index
    %65 = vector.load %arg4[%c7, %c0_30] : memref<16x256xf32, #tpu.memory_space<vmem>>, vector<1x256xf32>
    %66 = vector.broadcast %65 : vector<1x256xf32> to vector<16x256xf32>
    %67 = arith.addf %64, %66 : vector<16x256xf32>
    %cst_31 = arith.constant 5.000000e-01 : f32
    %68 = vector.broadcast %cst_31 : f32 to vector<16x256xf32>
    %69 = arith.mulf %68, %67 : vector<16x256xf32>
    %70 = math.tanh %69 : vector<16x256xf32>
    %cst_32 = arith.constant 1.000000e+00 : f32
    %71 = vector.broadcast %cst_32 : f32 to vector<16x256xf32>
    %72 = arith.addf %71, %70 : vector<16x256xf32>
    %cst_33 = arith.constant 5.000000e-01 : f32
    %73 = vector.broadcast %cst_33 : f32 to vector<16x256xf32>
    %74 = arith.mulf %73, %72 : vector<16x256xf32>
    %75 = arith.mulf %67, %74 : vector<16x256xf32>
    %76 = arith.truncf %75 : vector<16x256xf32> to vector<16x256xbf16>
    %c0_34 = arith.constant 0 : index
    %c0_35 = arith.constant 0 : index
    %77 = vector.load %arg3[%c0_34, %c0_35] : memref<256x128xbf16, #tpu.memory_space<vmem>>, vector<256x128xbf16>
    %cst_36 = arith.constant dense<0.000000e+00> : vector<16x128xf32>
    %78 = tpu.matmul %76, %77, %cst_36 {dimension_numbers = #tpu.dot_dimension_numbers<[1], [0], [0], [1], [0, 0, 1, 1], [], []>} : vector<16x256xbf16>, vector<256x128xbf16>, vector<16x128xf32> -> vector<16x128xf32>
    %c8 = arith.constant 8 : index
    %c0_37 = arith.constant 0 : index
    %79 = vector.load %arg4[%c8, %c0_37] : memref<16x256xf32, #tpu.memory_space<vmem>>, vector<1x128xf32>
    %80 = vector.broadcast %79 : vector<1x128xf32> to vector<16x128xf32>
    %81 = arith.addf %78, %80 : vector<16x128xf32>
    %c0_38 = arith.constant 0 : index
    %c0_39 = arith.constant 0 : index
    %82 = vector.load %arg5[%c0_38, %c0_39] : memref<16x128xf32, #tpu.memory_space<vmem>>, vector<16x128xf32>
    tpu.vector_store %arg5[%c0_38, %c0_39], %81 {strides = array<i32>} : memref<16x128xf32, #tpu.memory_space<vmem>>, vector<16x128xf32>,
    return
  }
  func.func @transform_0(%arg0: i32) -> (i32, i32) {
    %c0_i32 = arith.constant 0 : i32
    %c0_i32_0 = arith.constant 0 : i32
    return %arg0, %c0_i32 : i32, i32
  }
  func.func @transform_1(%arg0: i32) -> (i32, i32) {
    %c0_i32 = arith.constant 0 : i32
    %c0_i32_0 = arith.constant 0 : i32
    %c0_i32_1 = arith.constant 0 : i32
    return %c0_i32, %c0_i32_0 : i32, i32
  }
  func.func @transform_2(%arg0: i32) -> (i32, i32) {
    %c0_i32 = arith.constant 0 : i32
    %c0_i32_0 = arith.constant 0 : i32
    %c0_i32_1 = arith.constant 0 : i32
    return %c0_i32, %c0_i32_0 : i32, i32
  }
  func.func @transform_3(%arg0: i32) -> (i32, i32) {
    %c0_i32 = arith.constant 0 : i32
    %c0_i32_0 = arith.constant 0 : i32
    %c0_i32_1 = arith.constant 0 : i32
    return %c0_i32, %c0_i32_0 : i32, i32
  }
  func.func @transform_4(%arg0: i32) -> (i32, i32) {
    %c0_i32 = arith.constant 0 : i32
    %c0_i32_0 = arith.constant 0 : i32
    return %arg0, %c0_i32 : i32, i32
  }
}

</mosaic_0001>

<llo_original>
// kernel: simple_point_mlp_cond.1
$region0: #{simple_point_mlp_cond.1}
  #allocation0 [shape = 'u32[]', space=smem, size = 0x4, offset = 0x4, fixed_abs, tag = 'smem constant byte address 0x4 - core index']
  #allocation1 [shape = 'u32[144,128]{1,0:T(1,128)}', space=vmem, size = 0x12000, scoped, tag = 'internal scratch']
  %s0 = inlined_call_operand.vmem [shape: f32[48,4], index: 0, kind: input, shape index: {}]
  %s1 = inlined_call_operand.hbm [shape: bf16[640,256], index: 1, kind: input, shape index: {}]
  %s2 = inlined_call_operand.vmem [shape: bf16[256,128], index: 2, kind: input, shape index: {}]
  %s3 = inlined_call_operand.hbm [shape: f32[16,256], index: 3, kind: input, shape index: {}]
  %s4 = inlined_call_operand.vmem [shape: f32[48,128], index: 4, kind: output, shape index: {}]
  %s5 = sld [smem:[#allocation0]]
  $region57: #{simple_point_mlp_cond.1} parent=0
    _
  %s7 = ssub.s32 1, %s5
  %s8 = scalar_select 0, %s7, %s5
  $region1: #{simple_point_mlp_cond.1} parent=0
    #allocation2 [shape = 'u8[327680]{0}', space=vmem, size = 0x50000, scoped, tag = 'input window, operand 1, single buffered']
    #allocation3 [shape = 's32[2]{0}', space=sflag, size = 0x8, scoped, tag = 'scoped memory for simple_point_mlp_cond.1']
    #allocation4 [shape = 'u8[16384]{0}', space=vmem, size = 0x4000, scoped, tag = 'input window, operand 3, single buffered']
    #allocation5 [shape = 's32[1]{0}', space=sflag, size = 0x4, scoped, tag = 'scoped memory for simple_point_mlp_cond.1']
    %9 = vsyncpa [#allocation3], 0
    %10 = vsyncpa [#allocation5], 0
    loop: start=0, step=1, limit=5
    $region2: #{simple_point_mlp_cond.1} parent=1 // loop_pre_header
      _
    $region3: #{simple_point_mlp_cond.1} parent=1 // loop_header
      %s12 = sphi 0, %s16
      %p13 = scmp.ge.s32.totalorder %s12, 5
      %s22 = sphi 0, %s24
      %s25 = sphi 0, %s22
      %s26 = sphi 0, %s25
      %s42 = sphi 0, %s26
      %s46 = sphi 0, %s46
      %s48 = sphi 0, %s46
      %s49 = sphi 0, %s48
      %s63 = sphi 0, %s49
      %s67 = sphi 0, %s67
      %s69 = sphi 0, %s67
      %s70 = sphi 0, %s69
      %s84 = sphi 0, %s70
      %s88 = sphi 0, %s88
      %s90 = sphi 0, %s88
      %s91 = sphi 0, %s90
      %s105 = sphi 0, %s91
      %s111 = sphi 0, %s113
      %s114 = sphi 0, %s111
      %s115 = sphi 0, %s114
      %s131 = sphi 0, %s115
    $region4: #{simple_point_mlp_cond.1} parent=1 // loop_header_branch
      %15 = sbr.rel (%p13) target = $region8
    $region5: #{simple_point_mlp_cond.1} parent=1 // loop_body
      %s17 = ssub.s32 %s12, 1
      %s18 = ssub.s32 %s12, 2
      %s19 = sadd.s32 %s12, 1
      %s20 = ssub.s32 %s12, %s19
      %p21 = scmp.eq.s32.totalorder %s20, 0
      %s23 = sadd.s32 %s22, 1
      %s24 = scalar_select %p21, %s22, %s23
      %p27 = pneg %p21
      %p28 = scmp.eq.s32.totalorder %s12, 2
      %p29 = por %p27, %p28
      %p30 = scmp.ne.s32.totalorder %s22, %s25
      %p31 = scmp.eq.s32.totalorder %s12, 0
      %p32 = por %p30, %p31
      %p33 = scmp.ne.s32.totalorder %s22, %s25
      %p34 = scmp.eq.s32.totalorder %s17, 2
      %p35 = por %p33, %p34
      %p36 = scmp.ne.s32.totalorder %s25, %s26
      %p37 = scmp.eq.s32.totalorder %s17, 0
      %p38 = por %p36, %p37
      %p39 = scmp.ne.s32.totalorder %s25, %s26
      %p40 = scmp.eq.s32.totalorder %s18, 2
      %p41 = por %p39, %p40
      %p43 = scmp.ne.s32.totalorder %s26, %s42
      %p44 = scmp.eq.s32.totalorder %s18, 0
      %p45 = por %p43, %p44
      %s47 = sadd.s32 %s46, 1
      %p50 = scmp.eq.s32.totalorder %s12, 2
      %p51 = scmp.ne.s32.totalorder %s46, %s48
      %p52 = scmp.eq.s32.totalorder %s12, 0
      %p53 = por %p51, %p52
      %p54 = scmp.ne.s32.totalorder %s46, %s48
      %p55 = scmp.eq.s32.totalorder %s17, 2
      %p56 = por %p54, %p55
      %p57 = scmp.ne.s32.totalorder %s48, %s49
      %p58 = scmp.eq.s32.totalorder %s17, 0
      %p59 = por %p57, %p58
      %p60 = scmp.ne.s32.totalorder %s48, %s49
      %p61 = scmp.eq.s32.totalorder %s18, 2
      %p62 = por %p60, %p61
      %p64 = scmp.ne.s32.totalorder %s49, %s63
      %p65 = scmp.eq.s32.totalorder %s18, 0
      %p66 = por %p64, %p65
      %s68 = sadd.s32 %s67, 1
      %p71 = scmp.eq.s32.totalorder %s12, 2
      %p72 = scmp.ne.s32.totalorder %s67, %s69
      %p73 = scmp.eq.s32.totalorder %s12, 0
      %p74 = por %p72, %p73
      %p75 = scmp.ne.s32.totalorder %s67, %s69
      %p76 = scmp.eq.s32.totalorder %s17, 2
      %p77 = por %p75, %p76
      %p78 = scmp.ne.s32.totalorder %s69, %s70
      %p79 = scmp.eq.s32.totalorder %s17, 0
      %p80 = por %p78, %p79
      %p81 = scmp.ne.s32.totalorder %s69, %s70
      %p82 = scmp.eq.s32.totalorder %s18, 2
      %p83 = por %p81, %p82
      %p85 = scmp.ne.s32.totalorder %s70, %s84
      %p86 = scmp.eq.s32.totalorder %s18, 0
      %p87 = por %p85, %p86
      %s89 = sadd.s32 %s88, 1
      %p92 = scmp.eq.s32.totalorder %s12, 2
      %p93 = scmp.ne.s32.totalorder %s88, %s90
      %p94 = scmp.eq.s32.totalorder %s12, 0
      %p95 = por %p93, %p94
      %p96 = scmp.ne.s32.totalorder %s88, %s90
      %p97 = scmp.eq.s32.totalorder %s17, 2
      %p98 = por %p96, %p97
      %p99 = scmp.ne.s32.totalorder %s90, %s91
      %p100 = scmp.eq.s32.totalorder %s17, 0
      %p101 = por %p99, %p100
      %p102 = scmp.ne.s32.totalorder %s90, %s91
      %p103 = scmp.eq.s32.totalorder %s18, 2
      %p104 = por %p102, %p103
      %p106 = scmp.ne.s32.totalorder %s91, %s105
      %p107 = scmp.eq.s32.totalorder %s18, 0
      %p108 = por %p106, %p107
      %s109 = ssub.s32 %s12, %s19
      %p110 = scmp.eq.s32.totalorder %s109, 0
      %s112 = sadd.s32 %s111, 1
      %s113 = scalar_select %p110, %s111, %s112
      %p116 = pneg %p110
      %p117 = scmp.eq.s32.totalorder %s12, 2
      %p118 = por %p116, %p117
      %p119 = scmp.ne.s32.totalorder %s111, %s114
      %p120 = scmp.eq.s32.totalorder %s12, 0
      %p121 = por %p119, %p120
      %p122 = scmp.ne.s32.totalorder %s111, %s114
      %p123 = scmp.eq.s32.totalorder %s17, 2
      %p124 = por %p122, %p123
      %p125 = scmp.ne.s32.totalorder %s114, %s115
      %p126 = scmp.eq.s32.totalorder %s17, 0
      %p127 = por %p125, %p126
      %p128 = scmp.ne.s32.totalorder %s114, %s115
      %p129 = scmp.eq.s32.totalorder %s18, 2
      %p130 = por %p128, %p129
      %p132 = scmp.ne.s32.totalorder %s115, %s131
      %p133 = scmp.eq.s32.totalorder %s18, 0
      %p134 = por %p132, %p133
      %p135 = scmp.le.s32.totalorder 1, %s12
      %p136 = scmp.lt.s32.totalorder %s12, 4
      %p137 = pnand %p135, %p136
      %p138 = pneg %p137
      // Predicated region
      $region9: #{simple_point_mlp_cond.1} parent=5 // pred_check
        _
      $region10: #{simple_point_mlp_cond.1} parent=5 // pred_check_branch
        %140 = sbr.rel (%p137) target = $region12
      $region11: #{simple_point_mlp_cond.1} parent=5 // pred_region
        %s141 = ssub.s32 %s12, 1
        // Predicated region
        $region13: #{simple_point_mlp_cond.1} parent=11 // pred_check
          %p142 = pneg %p59
        $region14: #{simple_point_mlp_cond.1} parent=11 // pred_check_branch
          %144 = sbr.rel (%p142) target = $region16
        $region15: #{simple_point_mlp_cond.1} parent=11 // pred_region
          %s146 = ssub.s32 10240, 10240
          %147 = vsyncadd [#allocation3], %s146
          %s148 = sshll.u32 [#allocation2], 4
          %s149 = int_to_ptr.vmem [resolvable:$true] %s148
          %154 = dma.hbm_to_vmem [thread:$0]  %s1, 10240, %s149, [#allocation3], 128, 128, 8
        $region16: #{simple_point_mlp_cond.1} parent=11 // pred_fallthru
          _
        // Predicated region
        $region17: #{simple_point_mlp_cond.1} parent=11 // pred_check
          %p155 = pneg %p80
        $region18: #{simple_point_mlp_cond.1} parent=11 // pred_check_branch
          %157 = sbr.rel (%p155) target = $region20
        $region19: #{simple_point_mlp_cond.1} parent=11 // pred_region
          _
        $region20: #{simple_point_mlp_cond.1} parent=11 // pred_fallthru
          _
        // Predicated region
        $region21: #{simple_point_mlp_cond.1} parent=11 // pred_check
          %p158 = pneg %p101
        $region22: #{simple_point_mlp_cond.1} parent=11 // pred_check_branch
          %160 = sbr.rel (%p158) target = $region24
        $region23: #{simple_point_mlp_cond.1} parent=11 // pred_region
          %s162 = ssub.s32 512, 512
          %163 = vsyncadd [#allocation5], %s162
          %s164 = sshll.u32 [#allocation4], 4
          %s165 = int_to_ptr.vmem [resolvable:$true] %s164
          %170 = dma.hbm_to_vmem [thread:$0]  %s3, 512, %s165, [#allocation5], 256, 256, 16
        $region24: #{simple_point_mlp_cond.1} parent=11 // pred_fallthru
          _
      $region12: #{simple_point_mlp_cond.1} parent=5 // pred_fallthru
        _
      %p171 = scmp.lt.s32.totalorder %s12, 3
      // Predicated region
      $region25: #{simple_point_mlp_cond.1} parent=5 // pred_check
        %p172 = pneg %p171
      $region26: #{simple_point_mlp_cond.1} parent=5 // pred_check_branch
        %174 = sbr.rel (%p172) target = $region28
      $region27: #{simple_point_mlp_cond.1} parent=5 // pred_region
        // Predicated region
        $region29: #{simple_point_mlp_cond.1} parent=27 // pred_check
          %p175 = pneg %p32
        $region30: #{simple_point_mlp_cond.1} parent=27 // pred_check_branch
          %177 = sbr.rel (%p175) target = $region32
        $region31: #{simple_point_mlp_cond.1} parent=27 // pred_region
          %s178 = smul.u32 2, %s12
          %p179 = scmp.lt.s32.totalorder %s178, 5
          %s180 = scalar_select %p179, %s178, 5
          %s181 = smul.addr %s180, 8
          %s182 = scalar_lea.vmem %s0, %s181
          %s183 = smul.u32 2, %s12
        $region32: #{simple_point_mlp_cond.1} parent=27 // pred_fallthru
          _
      $region28: #{simple_point_mlp_cond.1} parent=5 // pred_fallthru
        _
      %p184 = scmp.le.s32.totalorder 1, %s12
      %p185 = scmp.lt.s32.totalorder %s12, 4
      %p186 = pnand %p184, %p185
      %p187 = pneg %p186
      // Predicated region
      $region33: #{simple_point_mlp_cond.1} parent=5 // pred_check
        _
      $region34: #{simple_point_mlp_cond.1} parent=5 // pred_check_branch
        %189 = sbr.rel (%p186) target = $region36
      $region35: #{simple_point_mlp_cond.1} parent=5 // pred_region
        %s190 = ssub.s32 %s12, 1
        // Predicated region
        $region37: #{simple_point_mlp_cond.1} parent=35 // pred_check
          %p191 = pneg %p59
        $region38: #{simple_point_mlp_cond.1} parent=35 // pred_check_branch
          %193 = sbr.rel (%p191) target = $region40
        $region39: #{simple_point_mlp_cond.1} parent=35 // pred_region
          %194 = dma.done [#allocation3], 10240
        $region40: #{simple_point_mlp_cond.1} parent=35 // pred_fallthru
          _
        // Predicated region
        $region41: #{simple_point_mlp_cond.1} parent=35 // pred_check
          %p195 = pneg %p101
        $region42: #{simple_point_mlp_cond.1} parent=35 // pred_check_branch
          %197 = sbr.rel (%p195) target = $region44
        $region43: #{simple_point_mlp_cond.1} parent=35 // pred_region
          %198 = dma.done [#allocation5], 512
        $region44: #{simple_point_mlp_cond.1} parent=35 // pred_fallthru
          _
        %s199 = smul.u32 2, %s17
        %p200 = scmp.lt.s32.totalorder %s199, 5
        %s201 = scalar_select %p200, %s199, 5
        %s202 = smul.addr %s201, 8
        %s203 = scalar_lea.vmem %s0, %s202
        %p204 = pneg %p38
        %p205 = pneg %p35
        %p206 = pneg %p59
        %p207 = pneg %p56
        %p208 = pneg %p80
        %p209 = pneg %p77
        %p210 = pneg %p101
        %p211 = pneg %p98
        %p212 = pneg %p127
        %p213 = pneg %p124
        %s214 = smul.u32 2, %s17
        %p215 = scmp.lt.s32.totalorder %s214, 5
        %s216 = scalar_select %p215, %s214, 5
        %s217 = smul.addr %s216, 8
        %s218 = scalar_lea.vmem %s4, %s217
        %s219 = smul.u32 2, %s17
        %p220 = scmp.lt.s32.totalorder %s219, 5
        %s221 = scalar_select %p220, %s219, 5
        %s222 = smul.addr %s221, 8
        %s223 = scalar_lea.vmem %s0, %s222
        %s224 = smul.u32 2, %s17
        %s225 = smul.u32 2, %s17
        %p226 = scmp.lt.s32.totalorder %s225, 5
        %s227 = scalar_select %p226, %s225, 5
        %s228 = smul.addr %s227, 8
        %s229 = scalar_lea.vmem %s4, %s228
        %s230 = smul.u32 2, %s17
        %v232 = vld [vmem:[%s223] sm:$0xff]
        %v233 = vld [vmem:[%s223 + $0x8] sm:$0xff]
        %v234 = vld [vmem:[#allocation4] ss:$0 sm:$0xff]
        %v235 = vld [vmem:[#allocation4 + $0x1] ss:$0 sm:$0xff]
        %237 = vset.pattern.permute.xlu0 2
        %238 = vperm.xlu0 %237, %v232
        %v239 = vpop.permute.xlu0 %238
        %242 = vset.pattern.permute.xlu0 2
        %243 = vperm.xlu0 %242, %v233
        %v244 = vpop.permute.xlu0 %243
        %v246 = vmul.f32 %v239, %v234
        %v247 = vmul.f32 %v244, %v234
        %v248 = vadd.f32 %v246, %v235
        %v249 = vadd.f32 %v247, %v235
        %v250 = vmul.f32 %v248, 0.5
        %v251 = vmul.f32 %v249, 0.5
        %v252 = vtanh.pop %v250
        %v253 = vtanh.pop %v251
        %v254 = vadd.f32 %v252, 1.0
        %v255 = vadd.f32 %v253, 1.0
        %v256 = vmul.f32 %v254, 0.5
        %v257 = vmul.f32 %v255, 0.5
        %v258 = vmul.f32 %v248, %v256
        %v259 = vmul.f32 %v249, %v257
        %v260 = vld [vmem:[#allocation2] sm:$0xff]
        %v261 = vld [vmem:[#allocation2 + $0x8] sm:$0xff]
        %v262 = vld [vmem:[#allocation2 + $0x10] sm:$0xff]
        %v263 = vld [vmem:[#allocation2 + $0x18] sm:$0xff]
        %v264 = vld [vmem:[#allocation2 + $0x20] sm:$0xff]
        %v265 = vld [vmem:[#allocation2 + $0x28] sm:$0xff]
        %v266 = vld [vmem:[#allocation2 + $0x30] sm:$0xff]
        %v267 = vld [vmem:[#allocation2 + $0x38] sm:$0xff]
        %v268 = vld [vmem:[#allocation2 + $0x40] sm:$0xff]
        %v269 = vld [vmem:[#allocation2 + $0x48] sm:$0xff]
        %v270 = vld [vmem:[#allocation2 + $0x50] sm:$0xff]
        %v271 = vld [vmem:[#allocation2 + $0x58] sm:$0xff]
        %v272 = vld [vmem:[#allocation2 + $0x60] sm:$0xff]
        %v273 = vld [vmem:[#allocation2 + $0x68] sm:$0xff]
        %v274 = vld [vmem:[#allocation2 + $0x70] sm:$0xff]
        %v275 = vld [vmem:[#allocation2 + $0x78] sm:$0xff]
        %v276 = vpack.c.bf16 %v259, %v258
        %s277 = scalar_lea.vmem [#allocation4], 2
        %v278 = vld [vmem:[%s277] ss:$8 sm:$0x3]
        %279 = vset.pattern.permute.xlu0 0
        %280 = vperm.xlu0 %279, %v232
        %v281 = vpop.permute.xlu0 %280
        %283 = vset.pattern.permute.xlu0 0
        %284 = vperm.xlu0 %283, %v233
        %v285 = vpop.permute.xlu0 %284
        %v288 = vlaneseq
        %v289 = vshrl.u32 %v288, 7
        %v290 = vsub.s32 0, %v289
        %v291 = vrot.slane %v278, %v290
        %v292 = vlaneseq
        %v293 = vshrl.u32 %v292, 7
        %v294 = vsub.s32 1, %v293
        %v295 = vrot.slane %v278, %v294
        %v298 = vmul.f32 %v281, %v291
        %v299 = vmul.f32 %v281, %v295
        %v300 = vmul.f32 %v285, %v291
        %v301 = vmul.f32 %v285, %v295
        %v318 = vunpack.c.l.b16 %v260
        %v319 = vunpack.c.h.b16 %v260
        %v320 = vunpack.c.l.b16 %v261
        %v321 = vunpack.c.h.b16 %v261
        %v322 = vunpack.c.l.b16 %v262
        %v323 = vunpack.c.h.b16 %v262
        %v324 = vunpack.c.l.b16 %v263
        %v325 = vunpack.c.h.b16 %v263
        %v326 = vunpack.c.l.b16 %v264
        %v327 = vunpack.c.h.b16 %v264
        %v328 = vunpack.c.l.b16 %v265
        %v329 = vunpack.c.h.b16 %v265
        %v330 = vunpack.c.l.b16 %v266
        %v331 = vunpack.c.h.b16 %v266
        %v332 = vunpack.c.l.b16 %v267
        %v333 = vunpack.c.h.b16 %v267
        %v334 = vunpack.c.l.b16 %v268
        %v335 = vunpack.c.h.b16 %v268
        %v336 = vunpack.c.l.b16 %v269
        %v337 = vunpack.c.h.b16 %v269
        %v338 = vunpack.c.l.b16 %v270
        %v339 = vunpack.c.h.b16 %v270
        %v340 = vunpack.c.l.b16 %v271
        %v341 = vunpack.c.h.b16 %v271
        %v342 = vunpack.c.l.b16 %v272
        %v343 = vunpack.c.h.b16 %v272
        %v344 = vunpack.c.l.b16 %v273
        %v345 = vunpack.c.h.b16 %v273
        %v346 = vunpack.c.l.b16 %v274
        %v347 = vunpack.c.h.b16 %v274
        %v348 = vunpack.c.l.b16 %v275
        %v349 = vunpack.c.h.b16 %v275
        %v350 = vpack.c.b16 %v320, %v318
        %v351 = vpack.c.b16 %v321, %v319
        %v352 = vpack.c.b16 %v324, %v322
        %v353 = vpack.c.b16 %v325, %v323
        %v354 = vpack.c.b16 %v328, %v326
        %v355 = vpack.c.b16 %v329, %v327
        %v356 = vpack.c.b16 %v332, %v330
        %v357 = vpack.c.b16 %v333, %v331
        %v358 = vpack.c.b16 %v336, %v334
        %v359 = vpack.c.b16 %v337, %v335
        %v360 = vpack.c.b16 %v340, %v338
        %v361 = vpack.c.b16 %v341, %v339
        %v362 = vpack.c.b16 %v344, %v342
        %v363 = vpack.c.b16 %v345, %v343
        %v364 = vpack.c.b16 %v348, %v346
        %v365 = vpack.c.b16 %v349, %v347
        %382 = vmatprep.subr.bf16.mxu0 %v351
        %383 = vmatpush1.bf16.msra.mxu0 %v350
        %384 = vmatprep.subr.bf16.mxu0 %v353
        %385 = vmatpush1.bf16.msra.mxu0 %v352
        %386 = vmatprep.subr.bf16.mxu0 %v355
        %387 = vmatpush1.bf16.msra.mxu0 %v354
        %388 = vmatprep.subr.bf16.mxu0 %v357
        %389 = vmatpush1.bf16.msra.mxu0 %v356
        %390 = vmatprep.subr.bf16.mxu0 %v359
        %391 = vmatpush1.bf16.msra.mxu0 %v358
        %392 = vmatprep.subr.bf16.mxu0 %v361
        %393 = vmatpush1.bf16.msra.mxu0 %v360
        %394 = vmatprep.subr.bf16.mxu0 %v363
        %395 = vmatpush1.bf16.msra.mxu0 %v362
        %396 = vmatprep.subr.bf16.mxu0 %v365
        %397 = vmatpush1.bf16.msra.mxu0 %v364
        %398 = vmatprep.subr.bf16.mxu0 0
        %399 = vmatpush1.bf16.msra.mxu0 0
        %400 = vmatprep.subr.bf16.mxu0 0
        %401 = vmatpush1.bf16.msra.mxu0 0
        %402 = vmatprep.subr.bf16.mxu0 0
        %403 = vmatpush1.bf16.msra.mxu0 0
        %404 = vmatprep.subr.bf16.mxu0 0
        %405 = vmatpush1.bf16.msra.mxu0 0
        %406 = vmatprep.subr.bf16.mxu0 0
        %407 = vmatpush1.bf16.msra.mxu0 0
        %408 = vmatprep.subr.bf16.mxu0 0
        %409 = vmatpush1.bf16.msra.mxu0 0
        %410 = vmatprep.subr.bf16.mxu0 0
        %411 = vmatpush1.bf16.msra.mxu0 0
        %412 = vmatprep.subr.bf16.mxu0 0
        %413 = vmatpush1.bf16.msra.mxu0 0
        %414 = vmatprep.mubr.bf16.mxu0 0
        %415 = vmatmul.mubr.bf16.gmra.mrb[0].mxu0 %v276
        %v416 = vpop.f32.mrb[0].mxu0
        %v417 = vadd.f32 %v298, %v416
        %v418 = vpop.f32.mrb[0].mxu0
        %v419 = vadd.f32 %v299, %v418
        %v420 = vpop.f32.mrb[0].mxu0
        %v421 = vadd.f32 %v300, %v420
        %v422 = vpop.f32.mrb[0].mxu0
        %v423 = vadd.f32 %v301, %v422
        %424 = vdwg.mxu0
        %s425 = scalar_lea.vmem [#allocation4], 3
        %v426 = vld [vmem:[%s425] ss:$8 sm:$0x3]
        %427 = vset.pattern.permute.xlu0 1
        %428 = vperm.xlu0 %427, %v232
        %v429 = vpop.permute.xlu0 %428
        %431 = vset.pattern.permute.xlu0 1
        %432 = vperm.xlu0 %431, %v233
        %v433 = vpop.permute.xlu0 %432
        %v436 = vlaneseq
        %v437 = vshrl.u32 %v436, 7
        %v438 = vsub.s32 0, %v437
        %v439 = vrot.slane %v426, %v438
        %v440 = vlaneseq
        %v441 = vshrl.u32 %v440, 7
        %v442 = vsub.s32 1, %v441
        %v443 = vrot.slane %v426, %v442
        %v446 = vmul.f32 %v429, %v439
        %v447 = vmul.f32 %v429, %v443
        %v448 = vmul.f32 %v433, %v439
        %v449 = vmul.f32 %v433, %v443
        %v450 = vadd.f32 %v417, %v446
        %v451 = vadd.f32 %v419, %v447
        %v452 = vadd.f32 %v421, %v448
        %v453 = vadd.f32 %v423, %v449
        %s454 = scalar_lea.vmem [#allocation4], 4
        %v455 = vld [vmem:[%s454] ss:$8 sm:$0x3]
        %456 = vset.pattern.permute.xlu0 3
        %457 = vperm.xlu0 %456, %v232
        %v458 = vpop.permute.xlu0 %457
        %460 = vset.pattern.permute.xlu0 3
        %461 = vperm.xlu0 %460, %v233
        %v462 = vpop.permute.xlu0 %461
        %v465 = vlaneseq
        %v466 = vshrl.u32 %v465, 7
        %v467 = vsub.s32 0, %v466
        %v468 = vrot.slane %v455, %v467
        %v469 = vlaneseq
        %v470 = vshrl.u32 %v469, 7
        %v471 = vsub.s32 1, %v470
        %v472 = vrot.slane %v455, %v471
        %v475 = vmul.f32 %v458, %v468
        %v476 = vmul.f32 %v458, %v472
        %v477 = vmul.f32 %v462, %v468
        %v478 = vmul.f32 %v462, %v472
        %v479 = vadd.f32 %v450, %v475
        %v480 = vadd.f32 %v451, %v476
        %v481 = vadd.f32 %v452, %v477
        %v482 = vadd.f32 %v453, %v478
        %s483 = scalar_lea.vmem [#allocation4], 5
        %v484 = vld [vmem:[%s483] ss:$8 sm:$0x3]
        %v486 = vlaneseq
        %v487 = vshrl.u32 %v486, 7
        %v488 = vsub.s32 0, %v487
        %v489 = vrot.slane %v484, %v488
        %v490 = vlaneseq
        %v491 = vshrl.u32 %v490, 7
        %v492 = vsub.s32 1, %v491
        %v493 = vrot.slane %v484, %v492
        %v496 = vadd.f32 %v479, %v489
        %v497 = vadd.f32 %v480, %v493
        %v498 = vadd.f32 %v481, %v489
        %v499 = vadd.f32 %v482, %v493
        %v500 = vmul.f32 %v496, 0.5
        %v501 = vmul.f32 %v497, 0.5
        %v502 = vmul.f32 %v498, 0.5
        %v503 = vmul.f32 %v499, 0.5
        %v504 = vtanh.pop %v500
        %v505 = vtanh.pop %v501
        %v506 = vtanh.pop %v502
        %v507 = vtanh.pop %v503
        %v508 = vadd.f32 %v504, 1.0
        %v509 = vadd.f32 %v505, 1.0
        %v510 = vadd.f32 %v506, 1.0
        %v511 = vadd.f32 %v507, 1.0
        %v512 = vmul.f32 %v508, 0.5
        %v513 = vmul.f32 %v509, 0.5
        %v514 = vmul.f32 %v510, 0.5
        %v515 = vmul.f32 %v511, 0.5
        %v516 = vmul.f32 %v496, %v512
        %v517 = vmul.f32 %v497, %v513
        %v518 = vmul.f32 %v498, %v514
        %v519 = vmul.f32 %v499, %v515
        %v520 = vpack.c.bf16 %v518, %v516
        %v521 = vpack.c.bf16 %v519, %v517
        %v522 = vld [vmem:[#allocation2 + $0x80] sm:$0xff]
        %v523 = vld [vmem:[#allocation2 + $0x88] sm:$0xff]
        %v524 = vld [vmem:[#allocation2 + $0x90] sm:$0xff]
        %v525 = vld [vmem:[#allocation2 + $0x98] sm:$0xff]
        %v526 = vld [vmem:[#allocation2 + $0xa0] sm:$0xff]
        %v527 = vld [vmem:[#allocation2 + $0xa8] sm:$0xff]
        %v528 = vld [vmem:[#allocation2 + $0xb0] sm:$0xff]
        %v529 = vld [vmem:[#allocation2 + $0xb8] sm:$0xff]
        %v530 = vld [vmem:[#allocation2 + $0xc0] sm:$0xff]
        %v531 = vld [vmem:[#allocation2 + $0xc8] sm:$0xff]
        %v532 = vld [vmem:[#allocation2 + $0xd0] sm:$0xff]
        %v533 = vld [vmem:[#allocation2 + $0xd8] sm:$0xff]
        %v534 = vld [vmem:[#allocation2 + $0xe0] sm:$0xff]
        %v535 = vld [vmem:[#allocation2 + $0xe8] sm:$0xff]
        %v536 = vld [vmem:[#allocation2 + $0xf0] sm:$0xff]
        %v537 = vld [vmem:[#allocation2 + $0xf8] sm:$0xff]
        %v538 = vld [vmem:[#allocation2 + $0x100] sm:$0xff]
        %v539 = vld [vmem:[#allocation2 + $0x108] sm:$0xff]
        %v540 = vld [vmem:[#allocation2 + $0x110] sm:$0xff]
        %v541 = vld [vmem:[#allocation2 + $0x118] sm:$0xff]
        %v542 = vld [vmem:[#allocation2 + $0x120] sm:$0xff]
        %v543 = vld [vmem:[#allocation2 + $0x128] sm:$0xff]
        %v544 = vld [vmem:[#allocation2 + $0x130] sm:$0xff]
        %v545 = vld [vmem:[#allocation2 + $0x138] sm:$0xff]
        %v546 = vld [vmem:[#allocation2 + $0x140] sm:$0xff]
        %v547 = vld [vmem:[#allocation2 + $0x148] sm:$0xff]
        %v548 = vld [vmem:[#allocation2 + $0x150] sm:$0xff]
        %v549 = vld [vmem:[#allocation2 + $0x158] sm:$0xff]
        %v550 = vld [vmem:[#allocation2 + $0x160] sm:$0xff]
        %v551 = vld [vmem:[#allocation2 + $0x168] sm:$0xff]
        %v552 = vld [vmem:[#allocation2 + $0x170] sm:$0xff]
        %v553 = vld [vmem:[#allocation2 + $0x178] sm:$0xff]
        %s554 = scalar_lea.vmem [#allocation4], 6
        %v555 = vld [vmem:[%s554] ss:$8 sm:$0x3]
        %v557 = vlaneseq
        %v558 = vshrl.u32 %v557, 7
        %v559 = vsub.s32 0, %v558
        %v560 = vrot.slane %v555, %v559
        %v561 = vlaneseq
        %v562 = vshrl.u32 %v561, 7
        %v563 = vsub.s32 1, %v562
        %v564 = vrot.slane %v555, %v563
        %v599 = vunpack.c.l.b16 %v522
        %v600 = vunpack.c.h.b16 %v522
        %v601 = vunpack.c.l.b16 %v523
        %v602 = vunpack.c.h.b16 %v523
        %v603 = vunpack.c.l.b16 %v524
        %v604 = vunpack.c.h.b16 %v524
        %v605 = vunpack.c.l.b16 %v525
        %v606 = vunpack.c.h.b16 %v525
        %v607 = vunpack.c.l.b16 %v526
        %v608 = vunpack.c.h.b16 %v526
        %v609 = vunpack.c.l.b16 %v527
        %v610 = vunpack.c.h.b16 %v527
        %v611 = vunpack.c.l.b16 %v528
        %v612 = vunpack.c.h.b16 %v528
        %v613 = vunpack.c.l.b16 %v529
        %v614 = vunpack.c.h.b16 %v529
        %v615 = vunpack.c.l.b16 %v530
        %v616 = vunpack.c.h.b16 %v530
        %v617 = vunpack.c.l.b16 %v531
        %v618 = vunpack.c.h.b16 %v531
        %v619 = vunpack.c.l.b16 %v532
        %v620 = vunpack.c.h.b16 %v532
        %v621 = vunpack.c.l.b16 %v533
        %v622 = vunpack.c.h.b16 %v533
        %v623 = vunpack.c.l.b16 %v534
        %v624 = vunpack.c.h.b16 %v534
        %v625 = vunpack.c.l.b16 %v535
        %v626 = vunpack.c.h.b16 %v535
        %v627 = vunpack.c.l.b16 %v536
        %v628 = vunpack.c.h.b16 %v536
        %v629 = vunpack.c.l.b16 %v537
        %v630 = vunpack.c.h.b16 %v537
        %v631 = vunpack.c.l.b16 %v538
        %v632 = vunpack.c.h.b16 %v538
        %v633 = vunpack.c.l.b16 %v539
        %v634 = vunpack.c.h.b16 %v539
        %v635 = vunpack.c.l.b16 %v540
        %v636 = vunpack.c.h.b16 %v540
        %v637 = vunpack.c.l.b16 %v541
        %v638 = vunpack.c.h.b16 %v541
        %v639 = vunpack.c.l.b16 %v542
        %v640 = vunpack.c.h.b16 %v542
        %v641 = vunpack.c.l.b16 %v543
        %v642 = vunpack.c.h.b16 %v543
        %v643 = vunpack.c.l.b16 %v544
        %v644 = vunpack.c.h.b16 %v544
        %v645 = vunpack.c.l.b16 %v545
        %v646 = vunpack.c.h.b16 %v545
        %v647 = vunpack.c.l.b16 %v546
        %v648 = vunpack.c.h.b16 %v546
        %v649 = vunpack.c.l.b16 %v547
        %v650 = vunpack.c.h.b16 %v547
        %v651 = vunpack.c.l.b16 %v548
        %v652 = vunpack.c.h.b16 %v548
        %v653 = vunpack.c.l.b16 %v549
        %v654 = vunpack.c.h.b16 %v549
        %v655 = vunpack.c.l.b16 %v550
        %v656 = vunpack.c.h.b16 %v550
        %v657 = vunpack.c.l.b16 %v551
        %v658 = vunpack.c.h.b16 %v551
        %v659 = vunpack.c.l.b16 %v552
        %v660 = vunpack.c.h.b16 %v552
        %v661 = vunpack.c.l.b16 %v553
        %v662 = vunpack.c.h.b16 %v553
        %v663 = vpack.c.b16 %v601, %v599
        %v664 = vpack.c.b16 %v602, %v600
        %v665 = vpack.c.b16 %v605, %v603
        %v666 = vpack.c.b16 %v606, %v604
        %v667 = vpack.c.b16 %v609, %v607
        %v668 = vpack.c.b16 %v610, %v608
        %v669 = vpack.c.b16 %v613, %v611
        %v670 = vpack.c.b16 %v614, %v612
        %v671 = vpack.c.b16 %v617, %v615
        %v672 = vpack.c.b16 %v618, %v616
        %v673 = vpack.c.b16 %v621, %v619
        %v674 = vpack.c.b16 %v622, %v620
        %v675 = vpack.c.b16 %v625, %v623
        %v676 = vpack.c.b16 %v626, %v624
        %v677 = vpack.c.b16 %v629, %v627
        %v678 = vpack.c.b16 %v630, %v628
        %v679 = vpack.c.b16 %v633, %v631
        %v680 = vpack.c.b16 %v634, %v632
        %v681 = vpack.c.b16 %v637, %v635
        %v682 = vpack.c.b16 %v638, %v636
        %v683 = vpack.c.b16 %v641, %v639
        %v684 = vpack.c.b16 %v642, %v640
        %v685 = vpack.c.b16 %v645, %v643
        %v686 = vpack.c.b16 %v646, %v644
        %v687 = vpack.c.b16 %v649, %v647
        %v688 = vpack.c.b16 %v650, %v648
        %v689 = vpack.c.b16 %v653, %v651
        %v690 = vpack.c.b16 %v654, %v652
        %v691 = vpack.c.b16 %v657, %v655
        %v692 = vpack.c.b16 %v658, %v656
        %v693 = vpack.c.b16 %v661, %v659
        %v694 = vpack.c.b16 %v662, %v660
        %727 = vmatprep.subr.bf16.mxu0 %v664
        %728 = vmatpush1.bf16.msra.mxu0 %v663
        %729 = vmatprep.subr.bf16.mxu0 %v666
        %730 = vmatpush1.bf16.msra.mxu0 %v665
        %731 = vmatprep.subr.bf16.mxu0 %v668
        %732 = vmatpush1.bf16.msra.mxu0 %v667
        %733 = vmatprep.subr.bf16.mxu0 %v670
        %734 = vmatpush1.bf16.msra.mxu0 %v669
        %735 = vmatprep.subr.bf16.mxu0 %v672
        %736 = vmatpush1.bf16.msra.mxu0 %v671
        %737 = vmatprep.subr.bf16.mxu0 %v674
        %738 = vmatpush1.bf16.msra.mxu0 %v673
        %739 = vmatprep.subr.bf16.mxu0 %v676
        %740 = vmatpush1.bf16.msra.mxu0 %v675
        %741 = vmatprep.subr.bf16.mxu0 %v678
        %742 = vmatpush1.bf16.msra.mxu0 %v677
        %743 = vmatprep.subr.bf16.mxu0 %v680
        %744 = vmatpush1.bf16.msra.mxu0 %v679
        %745 = vmatprep.subr.bf16.mxu0 %v682
        %746 = vmatpush1.bf16.msra.mxu0 %v681
        %747 = vmatprep.subr.bf16.mxu0 %v684
        %748 = vmatpush1.bf16.msra.mxu0 %v683
        %749 = vmatprep.subr.bf16.mxu0 %v686
        %750 = vmatpush1.bf16.msra.mxu0 %v685
        %751 = vmatprep.subr.bf16.mxu0 %v688
        %752 = vmatpush1.bf16.msra.mxu0 %v687
        %753 = vmatprep.subr.bf16.mxu0 %v690
        %754 = vmatpush1.bf16.msra.mxu0 %v689
        %755 = vmatprep.subr.bf16.mxu0 %v692
        %756 = vmatpush1.bf16.msra.mxu0 %v691
        %757 = vmatprep.subr.bf16.mxu0 %v694
        %758 = vmatpush1.bf16.msra.mxu0 %v693
        %759 = vmatprep.mubr.bf16.mxu0 %v521
        %760 = vmatmul.mubr.bf16.gmra.mrb[0].mxu0 %v520
        %v761 = vpop.f32.mrb[0].mxu0
        %v762 = vadd.f32 %v560, %v761
        %v763 = vpop.f32.mrb[0].mxu0
        %v764 = vadd.f32 %v564, %v763
        %v765 = vpop.f32.mrb[0].mxu0
        %v766 = vadd.f32 %v560, %v765
        %v767 = vpop.f32.mrb[0].mxu0
        %v768 = vadd.f32 %v564, %v767
        %769 = vdwg.mxu0
        %v770 = vmul.f32 %v762, 0.5
        %v771 = vmul.f32 %v764, 0.5
        %v772 = vmul.f32 %v766, 0.5
        %v773 = vmul.f32 %v768, 0.5
        %v774 = vtanh.pop %v770
        %v775 = vtanh.pop %v771
        %v776 = vtanh.pop %v772
        %v777 = vtanh.pop %v773
        %v778 = vadd.f32 %v774, 1.0
        %v779 = vadd.f32 %v775, 1.0
        %v780 = vadd.f32 %v776, 1.0
        %v781 = vadd.f32 %v777, 1.0
        %v782 = vmul.f32 %v778, 0.5
        %v783 = vmul.f32 %v779, 0.5
        %v784 = vmul.f32 %v780, 0.5
        %v785 = vmul.f32 %v781, 0.5
        %v786 = vmul.f32 %v762, %v782
        %v787 = vmul.f32 %v764, %v783
        %v788 = vmul.f32 %v766, %v784
        %v789 = vmul.f32 %v768, %v785
        %v790 = vpack.c.bf16 %v788, %v786
        %v791 = vpack.c.bf16 %v789, %v787
        %v792 = vld [vmem:[#allocation2 + $0x180] sm:$0xff]
        %v793 = vld [vmem:[#allocation2 + $0x188] sm:$0xff]
        %v794 = vld [vmem:[#allocation2 + $0x190] sm:$0xff]
        %v795 = vld [vmem:[#allocation2 + $0x198] sm:$0xff]
        %v796 = vld [vmem:[#allocation2 + $0x1a0] sm:$0xff]
        %v797 = vld [vmem:[#allocation2 + $0x1a8] sm:$0xff]
        %v798 = vld [vmem:[#allocation2 + $0x1b0] sm:$0xff]
        %v799 = vld [vmem:[#allocation2 + $0x1b8] sm:$0xff]
        %v800 = vld [vmem:[#allocation2 + $0x1c0] sm:$0xff]
        %v801 = vld [vmem:[#allocation2 + $0x1c8] sm:$0xff]
        %v802 = vld [vmem:[#allocation2 + $0x1d0] sm:$0xff]
        %v803 = vld [vmem:[#allocation2 + $0x1d8] sm:$0xff]
        %v804 = vld [vmem:[#allocation2 + $0x1e0] sm:$0xff]
        %v805 = vld [vmem:[#allocation2 + $0x1e8] sm:$0xff]
        %v806 = vld [vmem:[#allocation2 + $0x1f0] sm:$0xff]
        %v807 = vld [vmem:[#allocation2 + $0x1f8] sm:$0xff]
        %v808 = vld [vmem:[#allocation2 + $0x200] sm:$0xff]
        %v809 = vld [vmem:[#allocation2 + $0x208] sm:$0xff]
        %v810 = vld [vmem:[#allocation2 + $0x210] sm:$0xff]
        %v811 = vld [vmem:[#allocation2 + $0x218] sm:$0xff]
        %v812 = vld [vmem:[#allocation2 + $0x220] sm:$0xff]
        %v813 = vld [vmem:[#allocation2 + $0x228] sm:$0xff]
        %v814 = vld [vmem:[#allocation2 + $0x230] sm:$0xff]
        %v815 = vld [vmem:[#allocation2 + $0x238] sm:$0xff]
        %v816 = vld [vmem:[#allocation2 + $0x240] sm:$0xff]
        %v817 = vld [vmem:[#allocation2 + $0x248] sm:$0xff]
        %v818 = vld [vmem:[#allocation2 + $0x250] sm:$0xff]
        %v819 = vld [vmem:[#allocation2 + $0x258] sm:$0xff]
        %v820 = vld [vmem:[#allocation2 + $0x260] sm:$0xff]
        %v821 = vld [vmem:[#allocation2 + $0x268] sm:$0xff]
        %v822 = vld [vmem:[#allocation2 + $0x270] sm:$0xff]
        %v823 = vld [vmem:[#allocation2 + $0x278] sm:$0xff]
        %s824 = scalar_lea.vmem [#allocation4], 7
        %v825 = vld [vmem:[%s824] ss:$8 sm:$0x3]
        %v827 = vlaneseq
        %v828 = vshrl.u32 %v827, 7
        %v829 = vsub.s32 0, %v828
        %v830 = vrot.slane %v825, %v829
        %v831 = vlaneseq
        %v832 = vshrl.u32 %v831, 7
        %v833 = vsub.s32 1, %v832
        %v834 = vrot.slane %v825, %v833
        %v869 = vunpack.c.l.b16 %v792
        %v870 = vunpack.c.h.b16 %v792
        %v871 = vunpack.c.l.b16 %v793
        %v872 = vunpack.c.h.b16 %v793
        %v873 = vunpack.c.l.b16 %v794
        %v874 = vunpack.c.h.b16 %v794
        %v875 = vunpack.c.l.b16 %v795
        %v876 = vunpack.c.h.b16 %v795
        %v877 = vunpack.c.l.b16 %v796
        %v878 = vunpack.c.h.b16 %v796
        %v879 = vunpack.c.l.b16 %v797
        %v880 = vunpack.c.h.b16 %v797
        %v881 = vunpack.c.l.b16 %v798
        %v882 = vunpack.c.h.b16 %v798
        %v883 = vunpack.c.l.b16 %v799
        %v884 = vunpack.c.h.b16 %v799
        %v885 = vunpack.c.l.b16 %v800
        %v886 = vunpack.c.h.b16 %v800
        %v887 = vunpack.c.l.b16 %v801
        %v888 = vunpack.c.h.b16 %v801
        %v889 = vunpack.c.l.b16 %v802
        %v890 = vunpack.c.h.b16 %v802
        %v891 = vunpack.c.l.b16 %v803
        %v892 = vunpack.c.h.b16 %v803
        %v893 = vunpack.c.l.b16 %v804
        %v894 = vunpack.c.h.b16 %v804
        %v895 = vunpack.c.l.b16 %v805
        %v896 = vunpack.c.h.b16 %v805
        %v897 = vunpack.c.l.b16 %v806
        %v898 = vunpack.c.h.b16 %v806
        %v899 = vunpack.c.l.b16 %v807
        %v900 = vunpack.c.h.b16 %v807
        %v901 = vunpack.c.l.b16 %v808
        %v902 = vunpack.c.h.b16 %v808
        %v903 = vunpack.c.l.b16 %v809
        %v904 = vunpack.c.h.b16 %v809
        %v905 = vunpack.c.l.b16 %v810
        %v906 = vunpack.c.h.b16 %v810
        %v907 = vunpack.c.l.b16 %v811
        %v908 = vunpack.c.h.b16 %v811
        %v909 = vunpack.c.l.b16 %v812
        %v910 = vunpack.c.h.b16 %v812
        %v911 = vunpack.c.l.b16 %v813
        %v912 = vunpack.c.h.b16 %v813
        %v913 = vunpack.c.l.b16 %v814
        %v914 = vunpack.c.h.b16 %v814
        %v915 = vunpack.c.l.b16 %v815
        %v916 = vunpack.c.h.b16 %v815
        %v917 = vunpack.c.l.b16 %v816
        %v918 = vunpack.c.h.b16 %v816
        %v919 = vunpack.c.l.b16 %v817
        %v920 = vunpack.c.h.b16 %v817
        %v921 = vunpack.c.l.b16 %v818
        %v922 = vunpack.c.h.b16 %v818
        %v923 = vunpack.c.l.b16 %v819
        %v924 = vunpack.c.h.b16 %v819
        %v925 = vunpack.c.l.b16 %v820
        %v926 = vunpack.c.h.b16 %v820
        %v927 = vunpack.c.l.b16 %v821
        %v928 = vunpack.c.h.b16 %v821
        %v929 = vunpack.c.l.b16 %v822
        %v930 = vunpack.c.h.b16 %v822
        %v931 = vunpack.c.l.b16 %v823
        %v932 = vunpack.c.h.b16 %v823
        %v933 = vpack.c.b16 %v871, %v869
        %v934 = vpack.c.b16 %v872, %v870
        %v935 = vpack.c.b16 %v875, %v873
        %v936 = vpack.c.b16 %v876, %v874
        %v937 = vpack.c.b16 %v879, %v877
        %v938 = vpack.c.b16 %v880, %v878
        %v939 = vpack.c.b16 %v883, %v881
        %v940 = vpack.c.b16 %v884, %v882
        %v941 = vpack.c.b16 %v887, %v885
        %v942 = vpack.c.b16 %v888, %v886
        %v943 = vpack.c.b16 %v891, %v889
        %v944 = vpack.c.b16 %v892, %v890
        %v945 = vpack.c.b16 %v895, %v893
        %v946 = vpack.c.b16 %v896, %v894
        %v947 = vpack.c.b16 %v899, %v897
        %v948 = vpack.c.b16 %v900, %v898
        %v949 = vpack.c.b16 %v903, %v901
        %v950 = vpack.c.b16 %v904, %v902
        %v951 = vpack.c.b16 %v907, %v905
        %v952 = vpack.c.b16 %v908, %v906
        %v953 = vpack.c.b16 %v911, %v909
        %v954 = vpack.c.b16 %v912, %v910
        %v955 = vpack.c.b16 %v915, %v913
        %v956 = vpack.c.b16 %v916, %v914
        %v957 = vpack.c.b16 %v919, %v917
        %v958 = vpack.c.b16 %v920, %v918
        %v959 = vpack.c.b16 %v923, %v921
        %v960 = vpack.c.b16 %v924, %v922
        %v961 = vpack.c.b16 %v927, %v925
        %v962 = vpack.c.b16 %v928, %v926
        %v963 = vpack.c.b16 %v931, %v929
        %v964 = vpack.c.b16 %v932, %v930
        %997 = vmatprep.subr.bf16.mxu0 %v934
        %998 = vmatpush1.bf16.msra.mxu0 %v933
        %999 = vmatprep.subr.bf16.mxu0 %v936
        %1000 = vmatpush1.bf16.msra.mxu0 %v935
        %1001 = vmatprep.subr.bf16.mxu0 %v938
        %1002 = vmatpush1.bf16.msra.mxu0 %v937
        %1003 = vmatprep.subr.bf16.mxu0 %v940
        %1004 = vmatpush1.bf16.msra.mxu0 %v939
        %1005 = vmatprep.subr.bf16.mxu0 %v942
        %1006 = vmatpush1.bf16.msra.mxu0 %v941
        %1007 = vmatprep.subr.bf16.mxu0 %v944
        %1008 = vmatpush1.bf16.msra.mxu0 %v943
        %1009 = vmatprep.subr.bf16.mxu0 %v946
        %1010 = vmatpush1.bf16.msra.mxu0 %v945
        %1011 = vmatprep.subr.bf16.mxu0 %v948
        %1012 = vmatpush1.bf16.msra.mxu0 %v947
        %1013 = vmatprep.subr.bf16.mxu0 %v950
        %1014 = vmatpush1.bf16.msra.mxu0 %v949
        %1015 = vmatprep.subr.bf16.mxu0 %v952
        %1016 = vmatpush1.bf16.msra.mxu0 %v951
        %1017 = vmatprep.subr.bf16.mxu0 %v954
        %1018 = vmatpush1.bf16.msra.mxu0 %v953
        %1019 = vmatprep.subr.bf16.mxu0 %v956
        %1020 = vmatpush1.bf16.msra.mxu0 %v955
        %1021 = vmatprep.subr.bf16.mxu0 %v958
        %1022 = vmatpush1.bf16.msra.mxu0 %v957
        %1023 = vmatprep.subr.bf16.mxu0 %v960
        %1024 = vmatpush1.bf16.msra.mxu0 %v959
        %1025 = vmatprep.subr.bf16.mxu0 %v962
        %1026 = vmatpush1.bf16.msra.mxu0 %v961
        %1027 = vmatprep.subr.bf16.mxu0 %v964
        %1028 = vmatpush1.bf16.msra.mxu0 %v963
        %1029 = vmatprep.mubr.bf16.mxu0 %v791
        %1030 = vmatmul.mubr.bf16.gmra.mrb[0].mxu0 %v790
        %v1031 = vpop.f32.mrb[0].mxu0
        %v1032 = vadd.f32 %v830, %v1031
        %v1033 = vpop.f32.mrb[0].mxu0
        %v1034 = vadd.f32 %v834, %v1033
        %v1035 = vpop.f32.mrb[0].mxu0
        %v1036 = vadd.f32 %v830, %v1035
        %v1037 = vpop.f32.mrb[0].mxu0
        %v1038 = vadd.f32 %v834, %v1037
        %1039 = vdwg.mxu0
        %v1040 = vmul.f32 %v1032, 0.5
        %v1041 = vmul.f32 %v1034, 0.5
        %v1042 = vmul.f32 %v1036, 0.5
        %v1043 = vmul.f32 %v1038, 0.5
        %v1044 = vtanh.pop %v1040
        %v1045 = vtanh.pop %v1041
        %v1046 = vtanh.pop %v1042
        %v1047 = vtanh.pop %v1043
        %v1048 = vadd.f32 %v1044, 1.0
        %v1049 = vadd.f32 %v1045, 1.0
        %v1050 = vadd.f32 %v1046, 1.0
        %v1051 = vadd.f32 %v1047, 1.0
        %v1052 = vmul.f32 %v1048, 0.5
        %v1053 = vmul.f32 %v1049, 0.5
        %v1054 = vmul.f32 %v1050, 0.5
        %v1055 = vmul.f32 %v1051, 0.5
        %v1056 = vmul.f32 %v1032, %v1052
        %v1057 = vmul.f32 %v1034, %v1053
        %v1058 = vmul.f32 %v1036, %v1054
        %v1059 = vmul.f32 %v1038, %v1055
        %v1060 = vpack.c.bf16 %v1058, %v1056
        %v1061 = vpack.c.bf16 %v1059, %v1057
        %v1062 = vld [vmem:[%s2] sm:$0xf]
        %v1063 = vld [vmem:[%s2 + $0x4] sm:$0xf]
        %v1064 = vld [vmem:[%s2 + $0x8] sm:$0xf]
        %v1065 = vld [vmem:[%s2 + $0xc] sm:$0xf]
        %v1066 = vld [vmem:[%s2 + $0x10] sm:$0xf]
        %v1067 = vld [vmem:[%s2 + $0x14] sm:$0xf]
        %v1068 = vld [vmem:[%s2 + $0x18] sm:$0xf]
        %v1069 = vld [vmem:[%s2 + $0x1c] sm:$0xf]
        %v1070 = vld [vmem:[%s2 + $0x20] sm:$0xf]
        %v1071 = vld [vmem:[%s2 + $0x24] sm:$0xf]
        %v1072 = vld [vmem:[%s2 + $0x28] sm:$0xf]
        %v1073 = vld [vmem:[%s2 + $0x2c] sm:$0xf]
        %v1074 = vld [vmem:[%s2 + $0x30] sm:$0xf]
        %v1075 = vld [vmem:[%s2 + $0x34] sm:$0xf]
        %v1076 = vld [vmem:[%s2 + $0x38] sm:$0xf]
        %v1077 = vld [vmem:[%s2 + $0x3c] sm:$0xf]
        %v1078 = vld [vmem:[%s2 + $0x40] sm:$0xf]
        %v1079 = vld [vmem:[%s2 + $0x44] sm:$0xf]
        %v1080 = vld [vmem:[%s2 + $0x48] sm:$0xf]
        %v1081 = vld [vmem:[%s2 + $0x4c] sm:$0xf]
        %v1082 = vld [vmem:[%s2 + $0x50] sm:$0xf]
        %v1083 = vld [vmem:[%s2 + $0x54] sm:$0xf]
        %v1084 = vld [vmem:[%s2 + $0x58] sm:$0xf]
        %v1085 = vld [vmem:[%s2 + $0x5c] sm:$0xf]
        %v1086 = vld [vmem:[%s2 + $0x60] sm:$0xf]
        %v1087 = vld [vmem:[%s2 + $0x64] sm:$0xf]
        %v1088 = vld [vmem:[%s2 + $0x68] sm:$0xf]
        %v1089 = vld [vmem:[%s2 + $0x6c] sm:$0xf]
        %v1090 = vld [vmem:[%s2 + $0x70] sm:$0xf]
        %v1091 = vld [vmem:[%s2 + $0x74] sm:$0xf]
        %v1092 = vld [vmem:[%s2 + $0x78] sm:$0xf]
        %v1093 = vld [vmem:[%s2 + $0x7c] sm:$0xf]
        %v1094 = vld [vmem:[#allocation4 + $0x10] ss:$0 sm:$0xff]
        %v1127 = vunpack.c.l.b16 %v1062
        %v1128 = vunpack.c.l.b16 %v1063
        %v1129 = vunpack.c.l.b16 %v1064
        %v1130 = vunpack.c.l.b16 %v1065
        %v1131 = vunpack.c.l.b16 %v1066
        %v1132 = vunpack.c.l.b16 %v1067
        %v1133 = vunpack.c.l.b16 %v1068
        %v1134 = vunpack.c.l.b16 %v1069
        %v1135 = vunpack.c.l.b16 %v1070
        %v1136 = vunpack.c.l.b16 %v1071
        %v1137 = vunpack.c.l.b16 %v1072
        %v1138 = vunpack.c.l.b16 %v1073
        %v1139 = vunpack.c.l.b16 %v1074
        %v1140 = vunpack.c.l.b16 %v1075
        %v1141 = vunpack.c.l.b16 %v1076
        %v1142 = vunpack.c.l.b16 %v1077
        %v1143 = vunpack.c.l.b16 %v1078
        %v1144 = vunpack.c.l.b16 %v1079
        %v1145 = vunpack.c.l.b16 %v1080
        %v1146 = vunpack.c.l.b16 %v1081
        %v1147 = vunpack.c.l.b16 %v1082
        %v1148 = vunpack.c.l.b16 %v1083
        %v1149 = vunpack.c.l.b16 %v1084
        %v1150 = vunpack.c.l.b16 %v1085
        %v1151 = vunpack.c.l.b16 %v1086
        %v1152 = vunpack.c.l.b16 %v1087
        %v1153 = vunpack.c.l.b16 %v1088
        %v1154 = vunpack.c.l.b16 %v1089
        %v1155 = vunpack.c.l.b16 %v1090
        %v1156 = vunpack.c.l.b16 %v1091
        %v1157 = vunpack.c.l.b16 %v1092
        %v1158 = vunpack.c.l.b16 %v1093
        %v1159 = vpack.c.b16 %v1128, %v1127
        %v1160 = vpack.c.b16 %v1130, %v1129
        %v1161 = vpack.c.b16 %v1132, %v1131
        %v1162 = vpack.c.b16 %v1134, %v1133
        %v1163 = vpack.c.b16 %v1136, %v1135
        %v1164 = vpack.c.b16 %v1138, %v1137
        %v1165 = vpack.c.b16 %v1140, %v1139
        %v1166 = vpack.c.b16 %v1142, %v1141
        %v1167 = vpack.c.b16 %v1144, %v1143
        %v1168 = vpack.c.b16 %v1146, %v1145
        %v1169 = vpack.c.b16 %v1148, %v1147
        %v1170 = vpack.c.b16 %v1150, %v1149
        %v1171 = vpack.c.b16 %v1152, %v1151
        %v1172 = vpack.c.b16 %v1154, %v1153
        %v1173 = vpack.c.b16 %v1156, %v1155
        %v1174 = vpack.c.b16 %v1158, %v1157
        %1191 = vmatprep.subr.bf16.mxu0 0
        %1192 = vmatpush1.bf16.msra.mxu0 %v1159
        %1193 = vmatprep.subr.bf16.mxu0 0
        %1194 = vmatpush1.bf16.msra.mxu0 %v1160
        %1195 = vmatprep.subr.bf16.mxu0 0
        %1196 = vmatpush1.bf16.msra.mxu0 %v1161
        %1197 = vmatprep.subr.bf16.mxu0 0
        %1198 = vmatpush1.bf16.msra.mxu0 %v1162
        %1199 = vmatprep.subr.bf16.mxu0 0
        %1200 = vmatpush1.bf16.msra.mxu0 %v1163
        %1201 = vmatprep.subr.bf16.mxu0 0
        %1202 = vmatpush1.bf16.msra.mxu0 %v1164
        %1203 = vmatprep.subr.bf16.mxu0 0
        %1204 = vmatpush1.bf16.msra.mxu0 %v1165
        %1205 = vmatprep.subr.bf16.mxu0 0
        %1206 = vmatpush1.bf16.msra.mxu0 %v1166
        %1207 = vmatprep.subr.bf16.mxu0 0
        %1208 = vmatpush1.bf16.msra.mxu0 %v1167
        %1209 = vmatprep.subr.bf16.mxu0 0
        %1210 = vmatpush1.bf16.msra.mxu0 %v1168
        %1211 = vmatprep.subr.bf16.mxu0 0
        %1212 = vmatpush1.bf16.msra.mxu0 %v1169
        %1213 = vmatprep.subr.bf16.mxu0 0
        %1214 = vmatpush1.bf16.msra.mxu0 %v1170
        %1215 = vmatprep.subr.bf16.mxu0 0
        %1216 = vmatpush1.bf16.msra.mxu0 %v1171
        %1217 = vmatprep.subr.bf16.mxu0 0
        %1218 = vmatpush1.bf16.msra.mxu0 %v1172
        %1219 = vmatprep.subr.bf16.mxu0 0
        %1220 = vmatpush1.bf16.msra.mxu0 %v1173
        %1221 = vmatprep.subr.bf16.mxu0 0
        %1222 = vmatpush1.bf16.msra.mxu0 %v1174
        %1223 = vmatprep.mubr.bf16.mxu0 %v1061
        %1224 = vmatmul.mubr.bf16.gmra.mrb[0].mxu0 %v1060
        %v1225 = vpop.f32.mrb[0].mxu0
        %v1226 = vadd.f32 %v1094, %v1225
        %v1227 = vpop.f32.mrb[0].mxu0
        %v1228 = vpop.f32.mrb[0].mxu0
        %v1229 = vadd.f32 %v1094, %v1228
        %v1230 = vpop.f32.mrb[0].mxu0
        %1231 = vdwg.mxu0
        %1232 = vst [vmem:[%s229] sm:$0xff] %v1226
        %1233 = vst [vmem:[%s229 + $0x8] sm:$0xff] %v1229
        %s1234 = smul.u32 2, %s17
        %p1235 = scmp.lt.s32.totalorder %s1234, 5
        %s1236 = scalar_select %p1235, %s1234, 5
        %s1237 = smul.addr %s1236, 8
        %s1238 = scalar_lea.vmem %s4, %s1237
        // Predicated region
        $region45: #{simple_point_mlp_cond.1} parent=35 // pred_check
          %p1239 = pneg %p124
        $region46: #{simple_point_mlp_cond.1} parent=35 // pred_check_branch
          %1241 = sbr.rel (%p1239) target = $region48
        $region47: #{simple_point_mlp_cond.1} parent=35 // pred_region
          %s1242 = smul.u32 2, %s17
        $region48: #{simple_point_mlp_cond.1} parent=35 // pred_fallthru
          _
      $region36: #{simple_point_mlp_cond.1} parent=5 // pred_fallthru
        _
      %p1243 = scmp.le.s32.totalorder 2, %s12
      // Predicated region
      $region49: #{simple_point_mlp_cond.1} parent=5 // pred_check
        %p1244 = pneg %p1243
      $region50: #{simple_point_mlp_cond.1} parent=5 // pred_check_branch
        %1246 = sbr.rel (%p1244) target = $region52
      $region51: #{simple_point_mlp_cond.1} parent=5 // pred_region
        %s1247 = ssub.s32 %s12, 2
        // Predicated region
        $region53: #{simple_point_mlp_cond.1} parent=51 // pred_check
          %p1248 = pneg %p130
        $region54: #{simple_point_mlp_cond.1} parent=51 // pred_check_branch
          %1250 = sbr.rel (%p1248) target = $region56
        $region55: #{simple_point_mlp_cond.1} parent=51 // pred_region
          %s1251 = smul.u32 2, %s18
          %p1252 = scmp.lt.s32.totalorder %s1251, 5
          %s1253 = scalar_select %p1252, %s1251, 5
          %s1254 = smul.addr %s1253, 8
          %s1255 = scalar_lea.vmem %s4, %s1254
        $region56: #{simple_point_mlp_cond.1} parent=51 // pred_fallthru
          _
      $region52: #{simple_point_mlp_cond.1} parent=5 // pred_fallthru
        _
    $region6: #{simple_point_mlp_cond.1} parent=1 // loop_footer
      %s16 = sadd.s32 1, %s12
    $region7: #{simple_point_mlp_cond.1} parent=1 // loop_footer_branch
      %11 = sbr.rel target = $region3
    $region8: #{simple_point_mlp_cond.1} parent=1 // loop_exit
      _
    %1256 = vsyncpa [#allocation3], 1
    %s1257 = scalar_lea.sflag [#allocation3], 1
    %1258 = vsyncpa %s1257, 1
    %1259 = vsyncpa [#allocation5], 1

</llo_original>
